<compile_context>
chip_gen: v5e
topology: v5e:2x2
jax: 0.10.0
libtpu: 0.0.40
codegen_flags: <defaults>
</compile_context>

<pallas_src>
import jax
import jax.numpy as jnp
from jax import lax
from jax.experimental import pallas as pl
from jax.experimental.pallas import tpu as pltpu


def _make_ntxen_kernel(n: int, num_labels: int, temperature: float,
                       sigma: float, inf: float):
    gamma = 1.0 / (2.0 * sigma ** 2)
    sqrt_inv_temp = (1.0 / temperature) ** 0.5

    def kernel(zi_ref, zj_ref, lab_ref, labt_ref, loss_ref):
        # zi_ref/zj_ref : [N, D] embeddings of the two views (native dtype)
        # lab_ref       : [N, L] labels (sublane-oriented)
        # labt_ref      : [L, N] labels (lane-oriented copy)
        # loss_ref      : (1, 1) SMEM scalar output

        # --- F.normalize(p=2, dim=-1, eps=1e-12) with 1/temperature folded in.
        zi = zi_ref[...].astype(jnp.float32)
        zj = zj_ref[...].astype(jnp.float32)
        zi = zi * (lax.rsqrt(jnp.maximum(jnp.sum(zi * zi, axis=-1, keepdims=True),
                                         1e-24)) * sqrt_inv_temp)
        zj = zj * (lax.rsqrt(jnp.maximum(jnp.sum(zj * zj, axis=-1, keepdims=True),
                                         1e-24)) * sqrt_inv_temp)

        # --- the three unique NxN blocks of the 2Nx2N similarity matrix
        #     [[A, B], [B.T, C]]; B.T is never materialized.
        dn = (((1,), (1,)), ((), ()))                       # contract dim 1 w/ 1
        A = lax.dot_general(zi, zi, dn, preferred_element_type=jnp.float32)
        C = lax.dot_general(zj, zj, dn, preferred_element_type=jnp.float32)
        B = lax.dot_general(zi, zj, dn, preferred_element_type=jnp.float32)

        # NxN diagonal mask (only the zii/zjj/K0 blocks need it).
        row = lax.broadcasted_iota(jnp.int32, (n, n), 0)
        col = lax.broadcasted_iota(jnp.int32, (n, n), 1)
        diag = row == col
        A = jnp.where(diag, A - inf, A)                     # sim_zii - INF*eye
        C = jnp.where(diag, C - inf, C)                     # sim_zjj - INF*eye

        # --- log-softmax row statistics of the 2N rows, block-wise.
        # top rows i    : [A[i,:], B[i,:]]        -> [N,1] (lane reductions)
        mx_t = jnp.maximum(jnp.max(A, axis=1, keepdims=True),
                           jnp.max(B, axis=1, keepdims=True))
        lse_t = jnp.log(jnp.sum(jnp.exp(A - mx_t), axis=1, keepdims=True) +
                        jnp.sum(jnp.exp(B - mx_t), axis=1, keepdims=True)) + mx_t
        # bottom rows i : [B[:,i], C[i,:]]; A/C are exactly symmetric, so
        # axis=0 reductions give the same values in a [1,N] lane layout
        # (no transpose of B needed).
        mx_b = jnp.maximum(jnp.max(B, axis=0, keepdims=True),
                           jnp.max(C, axis=0, keepdims=True))
        lse_b = jnp.log(jnp.sum(jnp.exp(B - mx_b), axis=0, keepdims=True) +
                        jnp.sum(jnp.exp(C - mx_b), axis=0, keepdims=True)) + mx_b

        # --- RBF weights on the NxN label block only.  The full 2Nx2N weight
        #     matrix (after zeroing its diagonal) is [[K0, K], [K, K0]].
        #     d2 via broadcasted VPU differences (L is tiny; exact symmetry).
        lab = lab_ref[...].astype(jnp.float32)              # [N, L]
        labt = labt_ref[...].astype(jnp.float32)            # [L, N]
        d2 = jnp.zeros((n, n), jnp.float32)
        for l in range(num_labels):                         # static unroll, L tiny
            diff = lab[:, l:l + 1] - labt[l:l + 1, :]       # [N,1]-[1,N] -> [N,N]
            d2 = d2 + diff * diff
        K = jnp.exp(-gamma * d2)                            # single NxN exp pass
        K0 = jnp.where(diag, 0.0, K)

        # --- fold numpy's `weights /= weights.sum(axis=1)` (a per-COLUMN
        #     divide under broadcasting) and the final sum into block-wise
        #     reductions.  Big-matrix column sums = colsum(K0) + colsum(K);
        #     symmetry gives them in both layouts without a transpose.
        denom_lane = (jnp.sum(K0, axis=0, keepdims=True) +
                      jnp.sum(K, axis=0, keepdims=True))    # [1,N]
        denom_col = (jnp.sum(K0, axis=1, keepdims=True) +
                     jnp.sum(K, axis=1, keepdims=True))     # [N,1]

        # per-big-column weighted sums of w * log_softmax(sim):
        #   left  col j: sum_i K0[i,j](A[i,j]-lse_t[i]) + sum_i K[i,j](B[j,i]-lse_b[i])
        #   right col j: sum_i K [i,j](B[i,j]-lse_t[i]) + sum_i K0[i,j](C[i,j]-lse_b[i])
        # lse_t terms reduce along axis=0 ([1,N]); lse_b terms use the exact
        # symmetry of K/K0/C to reduce along axis=1 ([N,1]) instead of
        # materializing B.T.
        s_lane = (jnp.sum(K0 * (A - lse_t), axis=0, keepdims=True) +
                  jnp.sum(K * (B - lse_t), axis=0, keepdims=True))   # [1,N]
        s_col = (jnp.sum(K * (B - lse_b), axis=1, keepdims=True) +
                 jnp.sum(K0 * (C - lse_b), axis=1, keepdims=True))   # [N,1]

        # approx reciprocal on the (otherwise idle) EUP + one Newton step so
        # the final scalar stays within the 1e-4 tolerance.
        def recip(x):
            r = pl.reciprocal(x, approx=True)
            return r * (2.0 - x * r)

        loss = (-1.0 / n) * (jnp.sum(s_lane * recip(denom_lane)) +
                             jnp.sum(s_col * recip(denom_col)))
        loss_ref[0, 0] = loss

    return kernel


def weakly_supervised_ntxen_loss(z_i, z_j, labels,
                                 temperature: float = 0.1,
                                 sigma: float = 1.0,
                                 inf: float = 1e8):
    """JAX/Pallas equivalent of WeaklySupervisedNTXenLoss(kernel='rbf').forward.

    Only the default 'rbf' kernel branch (and return_logits=False) is
    implemented.  Inputs are passed at their native dtype; the f32 upcast
    happens inside the kernel.
    """
    N, D = z_i.shape
    assert z_j.shape == (N, D)
    assert labels.shape[0] == N, "Unexpected labels length: %d" % labels.shape[0]
    labels2d = labels.reshape(N, -1)
    L = labels2d.shape[1]

    kernel = _make_ntxen_kernel(N, L, temperature, sigma, inf)

    # Shape-dependent scoped-VMEM request: only raise the limit when the
    # single-block footprint (~10 live NxN f32 temporaries + inputs, x2 for
    # compiler headroom) actually needs it.  Past ~half a generation's VMEM
    # the row-tiled restructure (TODO at top of file) is required anyway.
    est_bytes = 4 * (10 * N * N + 3 * N * D + 2 * N * L) * 2
    compiler_params = None
    if est_bytes > 16 * 1024 * 1024:
        compiler_params = pltpu.CompilerParams(
            vmem_limit_bytes=min(est_bytes, 96 * 1024 * 1024))

    loss = pl.pallas_call(
        kernel,
        out_shape=jax.ShapeDtypeStruct((1, 1), jnp.float32),
        in_specs=[
            pl.BlockSpec(memory_space=pltpu.MemorySpace.VMEM),
            pl.BlockSpec(memory_space=pltpu.MemorySpace.VMEM),
            pl.BlockSpec(memory_space=pltpu.MemorySpace.VMEM),
            pl.BlockSpec(memory_space=pltpu.MemorySpace.VMEM),
        ],
        out_specs=pl.BlockSpec(memory_space=pltpu.MemorySpace.SMEM),
        compiler_params=compiler_params,
    )(z_i, z_j, labels2d, labels2d.T)   # lane-oriented label copy: tiny aux input
    return loss[0, 0]


def _reference_loss(z_i, z_j, labels, temperature=0.1, sigma=1.0, inf=1e8):
    """Pure-JAX reference (mirrors the PyTorch/numpy semantics exactly)."""
    N = z_i.shape[0]
    gamma = 1.0 / (2.0 * sigma ** 2)
    zi = z_i / jnp.maximum(jnp.linalg.norm(z_i, axis=-1, keepdims=True), 1e-12)
    zj = z_j / jnp.maximum(jnp.linalg.norm(z_j, axis=-1, keepdims=True), 1e-12)
    sim_zii = zi @ zi.T / temperature - inf * jnp.eye(N)
    sim_zjj = zj @ zj.T / temperature - inf * jnp.eye(N)
    sim_zij = zi @ zj.T / temperature
    all_labels = jnp.concatenate([labels.reshape(N, -1)] * 2, axis=0)
    d2 = jnp.maximum(
        jnp.sum(all_labels ** 2, 1)[:, None] + jnp.sum(all_labels ** 2, 1)[None, :]
        - 2 * all_labels @ all_labels.T, 0.0)
    w = jnp.exp(-gamma * d2) * (1 - jnp.eye(2 * N))
    w = w / jnp.sum(w, axis=1)[None, :]      # numpy-style broadcast of sum(axis=1)
    sim_Z = jnp.concatenate(
        [jnp.concatenate([sim_zii, sim_zij], axis=1),
         jnp.concatenate([sim_zij.T, sim_zjj], axis=1)], axis=0)
    log_sim_Z = jax.nn.log_softmax(sim_Z, axis=1)
    return -1.0 / N * jnp.sum(w * log_sim_Z)


if __name__ == "__main__":
    key = jax.random.PRNGKey(0)
    k1, k2, k3 = jax.random.split(key, 3)
    N, D, L = 8, 32, 3                   # batch=8, hidden=32, label-dim=3
    z_i = jax.random.normal(k1, (N, D), dtype=jnp.float32)
    z_j = jax.random.normal(k2, (N, D), dtype=jnp.float32)
    labels = jax.random.normal(k3, (N, L), dtype=jnp.float32)

    loss = weakly_supervised_ntxen_loss(z_i, z_j, labels)
    jax.block_until_ready(loss)

    ref = _reference_loss(z_i, z_j, labels)
    assert jnp.allclose(loss, ref, rtol=1e-4, atol=1e-4), (loss, ref)
    print("KERNEL_OK")
</pallas_src>

<mosaic_0001>
module attributes {stable_mosaic.version = 11 : i64} {
  func.func @kernel(%arg0: memref<8x32xf32, #tpu.memory_space<vmem>>, %arg1: memref<8x32xf32, #tpu.memory_space<vmem>>, %arg2: memref<8x3xf32, #tpu.memory_space<vmem>>, %arg3: memref<3x8xf32, #tpu.memory_space<vmem>>, %arg4: memref<1x1xf32, #tpu.memory_space<smem>>) attributes {dimension_semantics = [], scalar_prefetch = 0 : i64, scratch_operands = 0 : i64, tpu.core_type = #tpu.core_type<tc>} {
    %c0 = arith.constant 0 : index
    %c0_0 = arith.constant 0 : index
    %0 = vector.load %arg0[%c0, %c0_0] : memref<8x32xf32, #tpu.memory_space<vmem>>, vector<8x32xf32>
    %c0_1 = arith.constant 0 : index
    %c0_2 = arith.constant 0 : index
    %1 = vector.load %arg1[%c0_1, %c0_2] : memref<8x32xf32, #tpu.memory_space<vmem>>, vector<8x32xf32>
    %2 = arith.mulf %0, %0 : vector<8x32xf32>
    %cst = arith.constant dense<0.000000e+00> : vector<8xf32>
    %3 = vector.multi_reduction <add>, %2, %cst [1] : vector<8x32xf32> to vector<8xf32>
    %4 = vector.shape_cast %3 : vector<8xf32> to vector<8x1xf32>
    %cst_3 = arith.constant 1.000000e-24 : f32
    %5 = vector.broadcast %cst_3 : f32 to vector<8x1xf32>
    %6 = arith.maximumf %4, %5 : vector<8x1xf32>
    %7 = math.rsqrt %6 : vector<8x1xf32>
    %cst_4 = arith.constant 3.1622777 : f32
    %8 = vector.broadcast %cst_4 : f32 to vector<8x1xf32>
    %9 = arith.mulf %7, %8 : vector<8x1xf32>
    %10 = vector.broadcast %9 : vector<8x1xf32> to vector<8x32xf32>
    %11 = arith.mulf %0, %10 : vector<8x32xf32>
    %12 = arith.mulf %1, %1 : vector<8x32xf32>
    %cst_5 = arith.constant dense<0.000000e+00> : vector<8xf32>
    %13 = vector.multi_reduction <add>, %12, %cst_5 [1] : vector<8x32xf32> to vector<8xf32>
    %14 = vector.shape_cast %13 : vector<8xf32> to vector<8x1xf32>
    %cst_6 = arith.constant 1.000000e-24 : f32
    %15 = vector.broadcast %cst_6 : f32 to vector<8x1xf32>
    %16 = arith.maximumf %14, %15 : vector<8x1xf32>
    %17 = math.rsqrt %16 : vector<8x1xf32>
    %cst_7 = arith.constant 3.1622777 : f32
    %18 = vector.broadcast %cst_7 : f32 to vector<8x1xf32>
    %19 = arith.mulf %17, %18 : vector<8x1xf32>
    %20 = vector.broadcast %19 : vector<8x1xf32> to vector<8x32xf32>
    %21 = arith.mulf %1, %20 : vector<8x32xf32>
    %cst_8 = arith.constant dense<0.000000e+00> : vector<8x8xf32>
    %22 = tpu.matmul %11, %11, %cst_8 {dimension_numbers = #tpu.dot_dimension_numbers<[1], [1], [0], [0], [0, 0, 1, 0], [], []>} : vector<8x32xf32>, vector<8x32xf32>, vector<8x8xf32> -> vector<8x8xf32>
    %cst_9 = arith.constant dense<0.000000e+00> : vector<8x8xf32>
    %23 = tpu.matmul %21, %21, %cst_9 {dimension_numbers = #tpu.dot_dimension_numbers<[1], [1], [0], [0], [0, 0, 1, 0], [], []>} : vector<8x32xf32>, vector<8x32xf32>, vector<8x8xf32> -> vector<8x8xf32>
    %cst_10 = arith.constant dense<0.000000e+00> : vector<8x8xf32>
    %24 = tpu.matmul %11, %21, %cst_10 {dimension_numbers = #tpu.dot_dimension_numbers<[1], [1], [0], [0], [0, 0, 1, 0], [], []>} : vector<8x32xf32>, vector<8x32xf32>, vector<8x8xf32> -> vector<8x8xf32>
    %25 = tpu.iota {dimensions = array<i32: 0>} : vector<8x8xi32>
    %26 = tpu.iota {dimensions = array<i32: 1>} : vector<8x8xi32>
    %27 = arith.cmpi eq, %25, %26 : vector<8x8xi32>
    %cst_11 = arith.constant 1.000000e+08 : f32
    %28 = vector.broadcast %cst_11 : f32 to vector<8x8xf32>
    %29 = arith.subf %22, %28 : vector<8x8xf32>
    %30 = arith.select %27, %29, %22 : vector<8x8xi1>, vector<8x8xf32>
    %cst_12 = arith.constant 1.000000e+08 : f32
    %31 = vector.broadcast %cst_12 : f32 to vector<8x8xf32>
    %32 = arith.subf %23, %31 : vector<8x8xf32>
    %33 = arith.select %27, %32, %23 : vector<8x8xi1>, vector<8x8xf32>
    %cst_13 = arith.constant dense<0xFF800000> : vector<8xf32>
    %34 = vector.multi_reduction <maximumf>, %30, %cst_13 [1] : vector<8x8xf32> to vector<8xf32>
    %35 = vector.shape_cast %34 : vector<8xf32> to vector<8x1xf32>
    %cst_14 = arith.constant dense<0xFF800000> : vector<8xf32>
    %36 = vector.multi_reduction <maximumf>, %24, %cst_14 [1] : vector<8x8xf32> to vector<8xf32>
    %37 = vector.shape_cast %36 : vector<8xf32> to vector<8x1xf32>
    %38 = arith.maximumf %35, %37 : vector<8x1xf32>
    %39 = vector.broadcast %38 : vector<8x1xf32> to vector<8x8xf32>
    %40 = arith.subf %30, %39 : vector<8x8xf32>
    %41 = math.exp %40 : vector<8x8xf32>
    %cst_15 = arith.constant dense<0.000000e+00> : vector<8xf32>
    %42 = vector.multi_reduction <add>, %41, %cst_15 [1] : vector<8x8xf32> to vector<8xf32>
    %43 = vector.shape_cast %42 : vector<8xf32> to vector<8x1xf32>
    %44 = vector.broadcast %38 : vector<8x1xf32> to vector<8x8xf32>
    %45 = arith.subf %24, %44 : vector<8x8xf32>
    %46 = math.exp %45 : vector<8x8xf32>
    %cst_16 = arith.constant dense<0.000000e+00> : vector<8xf32>
    %47 = vector.multi_reduction <add>, %46, %cst_16 [1] : vector<8x8xf32> to vector<8xf32>
    %48 = vector.shape_cast %47 : vector<8xf32> to vector<8x1xf32>
    %49 = arith.addf %43, %48 : vector<8x1xf32>
    %50 = math.log %49 : vector<8x1xf32>
    %51 = arith.addf %50, %38 : vector<8x1xf32>
    %cst_17 = arith.constant dense<0xFF800000> : vector<8xf32>
    %52 = vector.multi_reduction <maximumf>, %24, %cst_17 [0] : vector<8x8xf32> to vector<8xf32>
    %53 = vector.shape_cast %52 : vector<8xf32> to vector<1x8xf32>
    %cst_18 = arith.constant dense<0xFF800000> : vector<8xf32>
    %54 = vector.multi_reduction <maximumf>, %33, %cst_18 [0] : vector<8x8xf32> to vector<8xf32>
    %55 = vector.shape_cast %54 : vector<8xf32> to vector<1x8xf32>
    %56 = arith.maximumf %53, %55 : vector<1x8xf32>
    %57 = vector.broadcast %56 : vector<1x8xf32> to vector<8x8xf32>
    %58 = arith.subf %24, %57 : vector<8x8xf32>
    %59 = math.exp %58 : vector<8x8xf32>
    %cst_19 = arith.constant dense<0.000000e+00> : vector<8xf32>
    %60 = vector.multi_reduction <add>, %59, %cst_19 [0] : vector<8x8xf32> to vector<8xf32>
    %61 = vector.shape_cast %60 : vector<8xf32> to vector<1x8xf32>
    %62 = vector.broadcast %56 : vector<1x8xf32> to vector<8x8xf32>
    %63 = arith.subf %33, %62 : vector<8x8xf32>
    %64 = math.exp %63 : vector<8x8xf32>
    %cst_20 = arith.constant dense<0.000000e+00> : vector<8xf32>
    %65 = vector.multi_reduction <add>, %64, %cst_20 [0] : vector<8x8xf32> to vector<8xf32>
    %66 = vector.shape_cast %65 : vector<8xf32> to vector<1x8xf32>
    %67 = arith.addf %61, %66 : vector<1x8xf32>
    %68 = math.log %67 : vector<1x8xf32>
    %69 = arith.addf %68, %56 : vector<1x8xf32>
    %c0_21 = arith.constant 0 : index
    %c0_22 = arith.constant 0 : index
    %70 = vector.load %arg2[%c0_21, %c0_22] : memref<8x3xf32, #tpu.memory_space<vmem>>, vector<8x3xf32>
    %c0_23 = arith.constant 0 : index
    %c0_24 = arith.constant 0 : index
    %71 = vector.load %arg3[%c0_23, %c0_24] : memref<3x8xf32, #tpu.memory_space<vmem>>, vector<3x8xf32>
    %cst_25 = arith.constant 0.000000e+00 : f32
    %72 = vector.broadcast %cst_25 : f32 to vector<8x8xf32>
    %73 = vector.extract_strided_slice %70 {offsets = [0, 0], sizes = [8, 1], strides = [1, 1]} : vector<8x3xf32> to vector<8x1xf32>
    %74 = vector.extract_strided_slice %71 {offsets = [0, 0], sizes = [1, 8], strides = [1, 1]} : vector<3x8xf32> to vector<1x8xf32>
    %75 = vector.broadcast %73 : vector<8x1xf32> to vector<8x8xf32>
    %76 = vector.broadcast %74 : vector<1x8xf32> to vector<8x8xf32>
    %77 = arith.subf %75, %76 : vector<8x8xf32>
    %78 = arith.mulf %77, %77 : vector<8x8xf32>
    %79 = arith.addf %72, %78 : vector<8x8xf32>
    %80 = vector.extract_strided_slice %70 {offsets = [0, 1], sizes = [8, 1], strides = [1, 1]} : vector<8x3xf32> to vector<8x1xf32>
    %81 = vector.extract_strided_slice %71 {offsets = [1, 0], sizes = [1, 8], strides = [1, 1]} : vector<3x8xf32> to vector<1x8xf32>
    %82 = vector.broadcast %80 : vector<8x1xf32> to vector<8x8xf32>
    %83 = vector.broadcast %81 : vector<1x8xf32> to vector<8x8xf32>
    %84 = arith.subf %82, %83 : vector<8x8xf32>
    %85 = arith.mulf %84, %84 : vector<8x8xf32>
    %86 = arith.addf %79, %85 : vector<8x8xf32>
    %87 = vector.extract_strided_slice %70 {offsets = [0, 2], sizes = [8, 1], strides = [1, 1]} : vector<8x3xf32> to vector<8x1xf32>
    %88 = vector.extract_strided_slice %71 {offsets = [2, 0], sizes = [1, 8], strides = [1, 1]} : vector<3x8xf32> to vector<1x8xf32>
    %89 = vector.broadcast %87 : vector<8x1xf32> to vector<8x8xf32>
    %90 = vector.broadcast %88 : vector<1x8xf32> to vector<8x8xf32>
    %91 = arith.subf %89, %90 : vector<8x8xf32>
    %92 = arith.mulf %91, %91 : vector<8x8xf32>
    %93 = arith.addf %86, %92 : vector<8x8xf32>
    %cst_26 = arith.constant -5.000000e-01 : f32
    %94 = vector.broadcast %cst_26 : f32 to vector<8x8xf32>
    %95 = arith.mulf %94, %93 : vector<8x8xf32>
    %96 = math.exp %95 : vector<8x8xf32>
    %cst_27 = arith.constant 0.000000e+00 : f32
    %97 = vector.broadcast %cst_27 : f32 to vector<8x8xf32>
    %98 = arith.select %27, %97, %96 : vector<8x8xi1>, vector<8x8xf32>
    %cst_28 = arith.constant dense<0.000000e+00> : vector<8xf32>
    %99 = vector.multi_reduction <add>, %98, %cst_28 [0] : vector<8x8xf32> to vector<8xf32>
    %100 = vector.shape_cast %99 : vector<8xf32> to vector<1x8xf32>
    %cst_29 = arith.constant dense<0.000000e+00> : vector<8xf32>
    %101 = vector.multi_reduction <add>, %96, %cst_29 [0] : vector<8x8xf32> to vector<8xf32>
    %102 = vector.shape_cast %101 : vector<8xf32> to vector<1x8xf32>
    %103 = arith.addf %100, %102 : vector<1x8xf32>
    %cst_30 = arith.constant dense<0.000000e+00> : vector<8xf32>
    %104 = vector.multi_reduction <add>, %98, %cst_30 [1] : vector<8x8xf32> to vector<8xf32>
    %105 = vector.shape_cast %104 : vector<8xf32> to vector<8x1xf32>
    %cst_31 = arith.constant dense<0.000000e+00> : vector<8xf32>
    %106 = vector.multi_reduction <add>, %96, %cst_31 [1] : vector<8x8xf32> to vector<8xf32>
    %107 = vector.shape_cast %106 : vector<8xf32> to vector<8x1xf32>
    %108 = arith.addf %105, %107 : vector<8x1xf32>
    %109 = vector.broadcast %51 : vector<8x1xf32> to vector<8x8xf32>
    %110 = arith.subf %30, %109 : vector<8x8xf32>
    %111 = arith.mulf %98, %110 : vector<8x8xf32>
    %cst_32 = arith.constant dense<0.000000e+00> : vector<8xf32>
    %112 = vector.multi_reduction <add>, %111, %cst_32 [0] : vector<8x8xf32> to vector<8xf32>
    %113 = vector.shape_cast %112 : vector<8xf32> to vector<1x8xf32>
    %114 = vector.broadcast %51 : vector<8x1xf32> to vector<8x8xf32>
    %115 = arith.subf %24, %114 : vector<8x8xf32>
    %116 = arith.mulf %96, %115 : vector<8x8xf32>
    %cst_33 = arith.constant dense<0.000000e+00> : vector<8xf32>
    %117 = vector.multi_reduction <add>, %116, %cst_33 [0] : vector<8x8xf32> to vector<8xf32>
    %118 = vector.shape_cast %117 : vector<8xf32> to vector<1x8xf32>
    %119 = arith.addf %113, %118 : vector<1x8xf32>
    %120 = vector.broadcast %69 : vector<1x8xf32> to vector<8x8xf32>
    %121 = arith.subf %24, %120 : vector<8x8xf32>
    %122 = arith.mulf %96, %121 : vector<8x8xf32>
    %cst_34 = arith.constant dense<0.000000e+00> : vector<8xf32>
    %123 = vector.multi_reduction <add>, %122, %cst_34 [1] : vector<8x8xf32> to vector<8xf32>
    %124 = vector.shape_cast %123 : vector<8xf32> to vector<8x1xf32>
    %125 = vector.broadcast %69 : vector<1x8xf32> to vector<8x8xf32>
    %126 = arith.subf %33, %125 : vector<8x8xf32>
    %127 = arith.mulf %98, %126 : vector<8x8xf32>
    %cst_35 = arith.constant dense<0.000000e+00> : vector<8xf32>
    %128 = vector.multi_reduction <add>, %127, %cst_35 [1] : vector<8x8xf32> to vector<8xf32>
    %129 = vector.shape_cast %128 : vector<8xf32> to vector<8x1xf32>
    %130 = arith.addf %124, %129 : vector<8x1xf32>
    %131 = tpu.reciprocal %103 {approx = true} : vector<1x8xf32> -> vector<1x8xf32>
    %132 = arith.mulf %103, %131 : vector<1x8xf32>
    %cst_36 = arith.constant 2.000000e+00 : f32
    %133 = vector.broadcast %cst_36 : f32 to vector<1x8xf32>
    %134 = arith.subf %133, %132 : vector<1x8xf32>
    %135 = arith.mulf %131, %134 : vector<1x8xf32>
    %136 = arith.mulf %119, %135 : vector<1x8xf32>
    %137 = vector.shape_cast %136 : vector<1x8xf32> to vector<1x1x8xf32>
    %cst_37 = arith.constant dense<0.000000e+00> : vector<1xf32>
    %138 = vector.multi_reduction <add>, %137, %cst_37 [1, 2] : vector<1x1x8xf32> to vector<1xf32>
    %139 = vector.shape_cast %138 : vector<1xf32> to vector<1x1x1xf32>
    %140 = vector.extract %139[0, 0, 0] : f32 from vector<1x1x1xf32>
    %141 = tpu.reciprocal %108 {approx = true} : vector<8x1xf32> -> vector<8x1xf32>
    %142 = arith.mulf %108, %141 : vector<8x1xf32>
    %cst_38 = arith.constant 2.000000e+00 : f32
    %143 = vector.broadcast %cst_38 : f32 to vector<8x1xf32>
    %144 = arith.subf %143, %142 : vector<8x1xf32>
    %145 = arith.mulf %141, %144 : vector<8x1xf32>
    %146 = arith.mulf %130, %145 : vector<8x1xf32>
    %147 = vector.shape_cast %146 : vector<8x1xf32> to vector<1x8x1xf32>
    %cst_39 = arith.constant dense<0.000000e+00> : vector<1xf32>
    %148 = vector.multi_reduction <add>, %147, %cst_39 [1, 2] : vector<1x8x1xf32> to vector<1xf32>
    %149 = vector.shape_cast %148 : vector<1xf32> to vector<1x1x1xf32>
    %150 = vector.extract %149[0, 0, 0] : f32 from vector<1x1x1xf32>
    %151 = arith.addf %140, %150 : f32
    %cst_40 = arith.constant -1.250000e-01 : f32
    %152 = arith.mulf %cst_40, %151 : f32
    %c0_41 = arith.constant 0 : index
    %c0_42 = arith.constant 0 : index
    %153 = memref.load %arg4[%c0_41, %c0_42] : memref<1x1xf32, #tpu.memory_space<smem>>
    memref.store %152, %arg4[%c0_41, %c0_42] : memref<1x1xf32, #tpu.memory_space<smem>>
    return
  }
}

</mosaic_0001>

<llo_original>
// kernel: tpu_custom_call.1
$region0: #{tpu_custom_call.1}
  #allocation0 [shape = 'u32[]', space=smem, size = 0x4, offset = 0x4, fixed_abs, tag = 'smem constant byte address 0x4 - core index']
  #allocation1 [shape = 'u32[72,128]{1,0:T(1,128)}', space=vmem, size = 0x9000, scoped, tag = 'internal scratch']
  %s0 = inlined_call_operand.vmem [shape: f32[8,32], index: 0, kind: input, shape index: {}]
  %s1 = inlined_call_operand.hbm [shape: f32[8,32], index: 1, kind: input, shape index: {}]
  %s2 = inlined_call_operand.vmem [shape: f32[8,3], index: 2, kind: input, shape index: {}]
  %s3 = inlined_call_operand.vmem [shape: f32[3,8], index: 3, kind: input, shape index: {}]
  %s4 = inlined_call_operand.hbm [shape: f32[1,1], index: 4, kind: output, shape index: {}]
  %s5 = sld [smem:[#allocation0]]
  $region30: #{tpu_custom_call.1} parent=0
    _
  %s7 = ssub.s32 1, %s5
  %s8 = scalar_select 0, %s7, %s5
  $region1: #{tpu_custom_call.1} parent=0
    #allocation2 [shape = 'u8[4096]{0}', space=vmem, size = 0x1000, scoped, tag = 'input window, operand 1, single buffered']
    #allocation3 [shape = 's32[1]{0}', space=sflag, size = 0x4, scoped, tag = 'scoped memory for tpu_custom_call.1']
    #allocation4 [shape = 's32[1]{0}', space=sflag, size = 0x4, scoped, tag = 'scoped memory for tpu_custom_call.1']
    #allocation5 [shape = 'u8[512]{0}', space=smem, size = 0x200, scoped, tag = 'output window, operand 0, single buffered']
    %9 = vsyncpa [#allocation3], 0
    %10 = vsyncpa [#allocation4], 0
    // Predicated region
    $region2: #{tpu_custom_call.1} parent=1 // pred_check
      _
    $region3: #{tpu_custom_call.1} parent=1 // pred_check_branch
      %12 = sbr.rel (0) target = $region5
    $region4: #{tpu_custom_call.1} parent=1 // pred_region
      _
    $region5: #{tpu_custom_call.1} parent=1 // pred_fallthru
      _
    // Predicated region
    $region6: #{tpu_custom_call.1} parent=1 // pred_check
      _
    $region7: #{tpu_custom_call.1} parent=1 // pred_check_branch
      %14 = sbr.rel (0) target = $region9
    $region8: #{tpu_custom_call.1} parent=1 // pred_region
      %16 = vsyncadd [#allocation3], 0
      %s18 = sshll.u32 %s1, 4
      %s19 = int_to_ptr.hbm [resolvable:$true] %s18
      %s20 = sshll.u32 [#allocation2], 4
      %s21 = int_to_ptr.vmem [resolvable:$true] %s20
      %23 = dma.hbm_to_vmem [thread:$0]  %s19, 128, %s21, [#allocation3]
    $region9: #{tpu_custom_call.1} parent=1 // pred_fallthru
      _
    // Predicated region
    $region10: #{tpu_custom_call.1} parent=1 // pred_check
      _
    $region11: #{tpu_custom_call.1} parent=1 // pred_check_branch
      %25 = sbr.rel (0) target = $region13
    $region12: #{tpu_custom_call.1} parent=1 // pred_region
      _
    $region13: #{tpu_custom_call.1} parent=1 // pred_fallthru
      _
    // Predicated region
    $region14: #{tpu_custom_call.1} parent=1 // pred_check
      _
    $region15: #{tpu_custom_call.1} parent=1 // pred_check_branch
      %27 = sbr.rel (0) target = $region17
    $region16: #{tpu_custom_call.1} parent=1 // pred_region
      _
    $region17: #{tpu_custom_call.1} parent=1 // pred_fallthru
      _
    // Predicated region
    $region18: #{tpu_custom_call.1} parent=1 // pred_check
      _
    $region19: #{tpu_custom_call.1} parent=1 // pred_check_branch
      %29 = sbr.rel (0) target = $region21
    $region20: #{tpu_custom_call.1} parent=1 // pred_region
      %31 = dma.done [#allocation3], 128
    $region21: #{tpu_custom_call.1} parent=1 // pred_fallthru
      _
    %v32 = vld [vmem:[%s0] sm:$0xff]
    %v33 = vld [vmem:[#allocation2] sm:$0xff]
    %v34 = vmul.f32 %v32, %v32
    %vm35 = vcmask 261120
    %v36 = vsel %vm35, %v34, 0.0
    %37 = vadd.xlane.f32.xlu0 %v36
    %v38 = vpop.xlane.xlu0 %37
    %v39 = vmax.f32 %v38, 1e-24
    %v40 = vrsqrt.pop %v39
    %v41 = vmul.f32 %v40, %v39
    %v42 = vmul.f32 %v41, %v40
    %v43 = vmul.f32 0.5, %v42
    %v44 = vsub.f32 1.5, %v43
    %v45 = vmul.f32 %v40, %v44
    %vm46 = vweird.f32 %v39
    %vm47 = vweird.f32 %v40
    %vm48 = vmor %vm46, %vm47
    %v49 = vsel %vm48, %v40, %v45
    %v50 = vmul.f32 %v49, 3.1622777
    %v51 = vmul.f32 %v32, %v50
    %v52 = vmul.f32 %v33, %v33
    %v53 = vsel %vm35, %v52, 0.0
    %54 = vadd.xlane.f32.xlu0 %v53
    %v55 = vpop.xlane.xlu0 %54
    %v56 = vmax.f32 %v55, 1e-24
    %v57 = vrsqrt.pop %v56
    %v58 = vmul.f32 %v57, %v56
    %v59 = vmul.f32 %v58, %v57
    %v60 = vmul.f32 0.5, %v59
    %v61 = vsub.f32 1.5, %v60
    %v62 = vmul.f32 %v57, %v61
    %vm63 = vweird.f32 %v56
    %vm64 = vweird.f32 %v57
    %vm65 = vmor %vm63, %vm64
    %v66 = vsel %vm65, %v57, %v62
    %v67 = vmul.f32 %v66, 3.1622777
    %v68 = vmul.f32 %v33, %v67
    %v70 = vsel %vm35, %v51, 0
    %72 = vmatpush.xpose.msra.mxu0 0.0
    %73 = vmatpush.xpose.msra.mxu0 0.0
    %74 = vmatpush.xpose.msra.mxu0 0.0
    %75 = vmatpush.xpose.msra.mxu0 0.0
    %76 = vmatpush.xpose.msra.mxu0 0.0
    %77 = vmatpush.xpose.msra.mxu0 0.0
    %78 = vmatpush.xpose.msra.mxu0 0.0
    %79 = vmatpush.xpose.msra.mxu0 0.0
    %80 = vmatpush.xpose.msra.mxu0 0.0
    %81 = vmatpush.xpose.msra.mxu0 0.0
    %82 = vmatpush.xpose.msra.mxu0 0.0
    %83 = vmatpush.xpose.msra.mxu0 0.0
    %84 = vmatpush.xpose.msra.mxu0 0.0
    %85 = vmatpush.xpose.msra.mxu0 0.0
    %86 = vmatpush.xpose.msra.mxu0 0.0
    %87 = vmatpush.xpose.msra.mxu0 %v70
    %88 = vmatmul.f32.gmra.mxu0 %v70
    %v89 = vpop.f32.mrf.mxu0
    %v90 = vadd.f32 0.0, %v89
    %91 = vdwg.mxu0
    %v93 = vsel %vm35, %v68, 0
    %95 = vmatpush.xpose.msra.mxu0 0.0
    %96 = vmatpush.xpose.msra.mxu0 0.0
    %97 = vmatpush.xpose.msra.mxu0 0.0
    %98 = vmatpush.xpose.msra.mxu0 0.0
    %99 = vmatpush.xpose.msra.mxu0 0.0
    %100 = vmatpush.xpose.msra.mxu0 0.0
    %101 = vmatpush.xpose.msra.mxu0 0.0
    %102 = vmatpush.xpose.msra.mxu0 0.0
    %103 = vmatpush.xpose.msra.mxu0 0.0
    %104 = vmatpush.xpose.msra.mxu0 0.0
    %105 = vmatpush.xpose.msra.mxu0 0.0
    %106 = vmatpush.xpose.msra.mxu0 0.0
    %107 = vmatpush.xpose.msra.mxu0 0.0
    %108 = vmatpush.xpose.msra.mxu0 0.0
    %109 = vmatpush.xpose.msra.mxu0 0.0
    %110 = vmatpush.xpose.msra.mxu0 %v93
    %111 = vmatmul.f32.gmra.mxu0 %v93
    %v112 = vpop.f32.mrf.mxu0
    %v113 = vadd.f32 0.0, %v112
    %114 = vdwg.mxu0
    %115 = vmatpush.xpose.msra.mxu0 0.0
    %116 = vmatpush.xpose.msra.mxu0 0.0
    %117 = vmatpush.xpose.msra.mxu0 0.0
    %118 = vmatpush.xpose.msra.mxu0 0.0
    %119 = vmatpush.xpose.msra.mxu0 0.0
    %120 = vmatpush.xpose.msra.mxu0 0.0
    %121 = vmatpush.xpose.msra.mxu0 0.0
    %122 = vmatpush.xpose.msra.mxu0 0.0
    %123 = vmatpush.xpose.msra.mxu0 0.0
    %124 = vmatpush.xpose.msra.mxu0 0.0
    %125 = vmatpush.xpose.msra.mxu0 0.0
    %126 = vmatpush.xpose.msra.mxu0 0.0
    %127 = vmatpush.xpose.msra.mxu0 0.0
    %128 = vmatpush.xpose.msra.mxu0 0.0
    %129 = vmatpush.xpose.msra.mxu0 0.0
    %130 = vmatpush.xpose.msra.mxu0 %v93
    %131 = vmatmul.f32.gmra.mxu0 %v70
    %v132 = vpop.f32.mrf.mxu0
    %v133 = vadd.f32 0.0, %v132
    %134 = vdwg.mxu0
    %v135 = vlaneseq
    %v136 = vshrl.u32 %v135, 7
    %v137 = vlaneseq
    %v138 = vand.u32 %v137, 127
    %vm139 = vcmp.eq.s32.totalorder %v136, %v138
    %v140 = vsub.f32 %v90, 1e+08
    %v141 = vsel %vm139, %v140, %v90
    %v142 = vsub.f32 %v113, 1e+08
    %v143 = vsel %vm139, %v142, %v113
    %vm144 = vcmask 64512
    %v145 = vsel %vm144, %v141, -inf
    %146 = vmax.xlane.f32.xlu0 %v145
    %v147 = vpop.xlane.xlu0 %146
    %v148 = vsel %vm144, %v133, -inf
    %149 = vmax.xlane.f32.xlu0 %v148
    %v150 = vpop.xlane.xlu0 %149
    %v151 = vmax.f32 %v147, %v150
    %v152 = vsub.f32 %v141, %v151
    %v153 = vmul.f32 %v152, 1.442695
    %v154 = vpow.pop %v153
    %v155 = vsel %vm144, %v154, 0.0
    %156 = vadd.xlane.f32.xlu0 %v155
    %v157 = vpop.xlane.xlu0 %156
    %v158 = vsub.f32 %v133, %v151
    %v159 = vmul.f32 %v158, 1.442695
    %v160 = vpow.pop %v159
    %v161 = vsel %vm144, %v160, 0.0
    %162 = vadd.xlane.f32.xlu0 %v161
    %v163 = vpop.xlane.xlu0 %162
    %v164 = vadd.f32 %v157, %v163
    %v165 = vlog2.pop %v164
    %v166 = vmul.f32 %v165, 0.6931472
    %v167 = vadd.f32 %v166, %v151
    %v168 = vrot.slane %v148, 4
    %v169 = vmax.f32 %v148, %v168
    %v170 = vrot.slane %v169, 2
    %v171 = vmax.f32 %v169, %v170
    %v172 = vrot.slane %v171, 1
    %v173 = vmax.f32 %v171, %v172
    %v174 = vsel %vm144, %v143, -inf
    %v175 = vrot.slane %v174, 4
    %v176 = vmax.f32 %v174, %v175
    %v177 = vrot.slane %v176, 2
    %v178 = vmax.f32 %v176, %v177
    %v179 = vrot.slane %v178, 1
    %v180 = vmax.f32 %v178, %v179
    %v181 = vmax.f32 %v173, %v180
    %v182 = vsub.f32 %v133, %v181
    %v183 = vmul.f32 %v182, 1.442695
    %v184 = vpow.pop %v183
    %v185 = vsel %vm144, %v184, 0.0
    %v186 = vrot.slane %v185, 4
    %v187 = vadd.f32 %v185, %v186
    %v188 = vrot.slane %v187, 2
    %v189 = vadd.f32 %v187, %v188
    %v190 = vrot.slane %v189, 1
    %v191 = vadd.f32 %v189, %v190
    %v192 = vsub.f32 %v143, %v181
    %v193 = vmul.f32 %v192, 1.442695
    %v194 = vpow.pop %v193
    %v195 = vsel %vm144, %v194, 0.0
    %v196 = vrot.slane %v195, 4
    %v197 = vadd.f32 %v195, %v196
    %v198 = vrot.slane %v197, 2
    %v199 = vadd.f32 %v197, %v198
    %v200 = vrot.slane %v199, 1
    %v201 = vadd.f32 %v199, %v200
    %v202 = vadd.f32 %v191, %v201
    %v203 = vlog2.pop %v202
    %v204 = vmul.f32 %v203, 0.6931472
    %v205 = vadd.f32 %v204, %v181
    %v206 = vld [vmem:[%s2] sm:$0xff]
    %v207 = vld [vmem:[%s3] sm:$0x7]
    %209 = vset.pattern.permute.xlu0 0
    %210 = vperm.xlu0 %209, %v206
    %v211 = vpop.permute.xlu0 %210
    %v213 = vperm.slane %v207, 0
    %v214 = vsub.f32 %v211, %v213
    %v215 = vmul.f32 %v214, %v214
    %v216 = vadd.f32 %v215, 0.0
    %217 = vset.pattern.permute.xlu0 1
    %218 = vperm.xlu0 %217, %v206
    %v219 = vpop.permute.xlu0 %218
    %v221 = vperm.slane %v207, 1
    %v222 = vsub.f32 %v219, %v221
    %v223 = vmul.f32 %v222, %v222
    %v224 = vadd.f32 %v216, %v223
    %225 = vset.pattern.permute.xlu0 2
    %226 = vperm.xlu0 %225, %v206
    %v227 = vpop.permute.xlu0 %226
    %v229 = vperm.slane %v207, 2
    %v230 = vsub.f32 %v227, %v229
    %v231 = vmul.f32 %v230, %v230
    %v232 = vadd.f32 %v224, %v231
    %v233 = vmul.f32 %v232, -0.5
    %v234 = vmul.f32 %v233, 1.442695
    %v235 = vpow.pop %v234
    %v236 = vsel %vm139, 0.0, %v235
    %v237 = vsel %vm144, %v236, 0.0
    %v238 = vrot.slane %v237, 4
    %v239 = vadd.f32 %v237, %v238
    %v240 = vrot.slane %v239, 2
    %v241 = vadd.f32 %v239, %v240
    %v242 = vrot.slane %v241, 1
    %v243 = vadd.f32 %v241, %v242
    %v244 = vsel %vm144, %v235, 0.0
    %v245 = vrot.slane %v244, 4
    %v246 = vadd.f32 %v244, %v245
    %v247 = vrot.slane %v246, 2
    %v248 = vadd.f32 %v246, %v247
    %v249 = vrot.slane %v248, 1
    %v250 = vadd.f32 %v248, %v249
    %v251 = vadd.f32 %v243, %v250
    %252 = vadd.xlane.f32.xlu0 %v237
    %v253 = vpop.xlane.xlu0 %252
    %254 = vadd.xlane.f32.xlu0 %v244
    %v255 = vpop.xlane.xlu0 %254
    %v256 = vadd.f32 %v253, %v255
    %v257 = vsub.f32 %v141, %v167
    %v258 = vmul.f32 %v236, %v257
    %v259 = vsel %vm144, %v258, 0.0
    %v260 = vrot.slane %v259, 4
    %v261 = vadd.f32 %v259, %v260
    %v262 = vrot.slane %v261, 2
    %v263 = vadd.f32 %v261, %v262
    %v264 = vrot.slane %v263, 1
    %v265 = vadd.f32 %v263, %v264
    %v266 = vsub.f32 %v133, %v167
    %v267 = vmul.f32 %v235, %v266
    %v268 = vsel %vm144, %v267, 0.0
    %v269 = vrot.slane %v268, 4
    %v270 = vadd.f32 %v268, %v269
    %v271 = vrot.slane %v270, 2
    %v272 = vadd.f32 %v270, %v271
    %v273 = vrot.slane %v272, 1
    %v274 = vadd.f32 %v272, %v273
    %v275 = vadd.f32 %v265, %v274
    %v276 = vsub.f32 %v133, %v205
    %v277 = vmul.f32 %v235, %v276
    %v278 = vsel %vm144, %v277, 0.0
    %279 = vadd.xlane.f32.xlu0 %v278
    %v280 = vpop.xlane.xlu0 %279
    %v281 = vsub.f32 %v143, %v205
    %v282 = vmul.f32 %v236, %v281
    %v283 = vsel %vm144, %v282, 0.0
    %284 = vadd.xlane.f32.xlu0 %v283
    %v285 = vpop.xlane.xlu0 %284
    %v286 = vadd.f32 %v280, %v285
    %v287 = vrcp.pop %v251
    %v288 = vmul.f32 %v251, %v287
    %v289 = vsub.f32 2.0, %v288
    %v290 = vmul.f32 %v287, %v289
    %v291 = vmul.f32 %v275, %v290
    %vm292 = vcmask 57344
    %v293 = vsel %vm292, %v291, 0.0
    %294 = vadd.xlane.f32.xlu0 %v293
    %v295 = vpop.xlane.xlu0 %294
    %v296 = vrot.slane %v295, 4
    %v297 = vadd.f32 %v295, %v296
    %v298 = vrot.slane %v297, 2
    %v299 = vadd.f32 %v297, %v298
    %v300 = vrot.slane %v299, 1
    %v301 = vadd.f32 %v299, %v300
    %s302 = vtos %v301
    %v303 = vrcp.pop %v256
    %v304 = vmul.f32 %v256, %v303
    %v305 = vsub.f32 2.0, %v304
    %v306 = vmul.f32 %v303, %v305
    %v307 = vmul.f32 %v286, %v306
    %vm308 = vcmask 7168
    %v309 = vsel %vm308, %v307, 0.0
    %310 = vadd.xlane.f32.xlu0 %v309
    %v311 = vpop.xlane.xlu0 %310
    %v312 = vrot.slane %v311, 4
    %v313 = vadd.f32 %v311, %v312
    %v314 = vrot.slane %v313, 2
    %v315 = vadd.f32 %v313, %v314
    %v316 = vrot.slane %v315, 1
    %v317 = vadd.f32 %v315, %v316
    %s318 = vtos %v317
    %s319 = sadd.f32 %s302, %s318
    %s320 = smul.f32 %s319, -0.125
    %s321 = scalar_lea.smem [#allocation5], 0
    %322 = sst [smem:[%s321]] %s320
    // Predicated region
    $region22: #{tpu_custom_call.1} parent=1 // pred_check
      _
    $region23: #{tpu_custom_call.1} parent=1 // pred_check_branch
      %324 = sbr.rel (0) target = $region25
    $region24: #{tpu_custom_call.1} parent=1 // pred_region
      %326 = vsyncadd [#allocation4], 0
      %s328 = sshll.u32 %s4, 4
      %s329 = int_to_ptr.hbm [resolvable:$true] %s328
      %331 = dma.smem_to_hbm [#allocation5], 16, %s329, [#allocation4]
    $region25: #{tpu_custom_call.1} parent=1 // pred_fallthru
      _
    // Predicated region
    $region26: #{tpu_custom_call.1} parent=1 // pred_check
      _
    $region27: #{tpu_custom_call.1} parent=1 // pred_check_branch
      %333 = sbr.rel (0) target = $region29
    $region28: #{tpu_custom_call.1} parent=1 // pred_region
      %335 = dma.done [#allocation4], 16
    $region29: #{tpu_custom_call.1} parent=1 // pred_fallthru
      _
    %336 = sfence
    %337 = vsyncpa [#allocation3], 1
    %338 = vsyncpa [#allocation4], 1

</llo_original>
